<compile_context>
chip_gen: v6e
topology: v6e:2x2x1
jax: 0.10.0
libtpu: 0.0.40
codegen_flags: <defaults>
</compile_context>

<pallas_src>
import jax
import jax.numpy as jnp
from jax.experimental import pallas as pl
from jax.experimental.pallas import tpu as pltpu


def _round_up(n, m):
    return ((n + m - 1) // m) * m


def _cdiv(a, b):
    return (a + b - 1) // b


def _autoencoder_kernel(x_ref,
                        w1_ref, b1_ref,
                        w2_ref, b2_ref,
                        w3_ref, b3_ref,
                        w4_ref, b4_ref,
                        out_ref):
    """relu(fc1) -> relu(fc2) -> relu(fc3) -> tanh(fc4); bf16 MXU, f32 accum."""
    h = x_ref[...].astype(jnp.bfloat16)

    h = jnp.dot(h, w1_ref[...], preferred_element_type=jnp.float32) + b1_ref[...]
    h = jnp.maximum(h, 0.0).astype(jnp.bfloat16)

    h = jnp.dot(h, w2_ref[...], preferred_element_type=jnp.float32) + b2_ref[...]
    h = jnp.maximum(h, 0.0).astype(jnp.bfloat16)          # "encoded"

    h = jnp.dot(h, w3_ref[...], preferred_element_type=jnp.float32) + b3_ref[...]
    h = jnp.maximum(h, 0.0).astype(jnp.bfloat16)

    h = jnp.dot(h, w4_ref[...], preferred_element_type=jnp.float32) + b4_ref[...]
    out_ref[...] = jnp.tanh(h).astype(out_ref.dtype)


def prepare_params(params):
    """One-time host-side padding/cast of the weights (NOT in the per-call path).

    Weights are stored (in, out), zero-padded to multiples of 128 lanes and
    cast to bf16; biases stay f32. Zero-padded columns/rows are numerically
    exact through relu/tanh and the final slice.
    """
    (w1, b1), (w2, b2), (w3, b3), (w4, b4) = params
    D, H1 = w1.shape
    H2 = w2.shape[1]
    Dp, H1p, H2p = _round_up(D, 128), _round_up(H1, 128), _round_up(H2, 128)

    def pad_w(w, ip, op):
        return jnp.zeros((ip, op), jnp.bfloat16).at[:w.shape[0], :w.shape[1]].set(
            w.astype(jnp.bfloat16))

    def pad_b(b, op):
        return jnp.zeros((1, op), jnp.float32).at[:, :b.shape[1]].set(
            b.astype(jnp.float32))

    padded = (pad_w(w1, Dp, H1p), pad_b(b1, H1p),
              pad_w(w2, H1p, H2p), pad_b(b2, H2p),
              pad_w(w3, H2p, H1p), pad_b(b3, H1p),
              pad_w(w4, H1p, Dp), pad_b(b4, Dp))
    dims = dict(D=D, H1=H1, H2=H2, Dp=Dp, H1p=H1p, H2p=H2p)
    return padded, dims


def autoencoder_forward(x, prepared, *, max_block_b=512):
    """Run MyAutoEncoderTanh.forward via a fused, lane-dense Pallas kernel.

    `prepared` is the output of `prepare_params` (padded weights are reused
    across calls). Use max_block_b=256 on v7x for extra VMEM headroom.
    """
    padded, dims = prepared
    B, D = x.shape
    assert D == dims["D"], "input feature dim mismatch with prepared params"
    Dp = dims["Dp"]

    # --- batch tiling: pad only to 8 sublanes, tile that exactly ------------
    B8 = _round_up(B, 8)
    n_steps = _cdiv(B8, max_block_b)
    if n_steps == 1 and B8 >= 16:
        n_steps = 2                       # give v7x's 2 TensorCores work to split
    block_b = _round_up(_cdiv(B8, n_steps), 8)
    n_steps = _cdiv(B8, block_b)
    Bp = block_b * n_steps

    # --- x to bf16 + minimal padding (skips the pad entirely when aligned) --
    if Bp == B and Dp == D:
        x_p = x.astype(jnp.bfloat16)
    else:
        x_p = jnp.zeros((Bp, Dp), jnp.bfloat16).at[:B, :D].set(
            x.astype(jnp.bfloat16))

    # Weights/biases: whole array resident in VMEM, no per-step double buffer.
    resident = pl.BlockSpec(memory_space=pltpu.MemorySpace.VMEM)

    in_specs = [
        pl.BlockSpec((block_b, Dp), lambda i: (i, 0)),   # x tile (pipelined)
        resident, resident,                              # fc1
        resident, resident,                              # fc2
        resident, resident,                              # fc3
        resident, resident,                              # fc4
    ]
    out_spec = pl.BlockSpec((block_b, Dp), lambda i: (i, 0))

    H1p, H2p = dims["H1p"], dims["H2p"]
    flops = 2 * Bp * (Dp * H1p + H1p * H2p + H2p * H1p + H1p * Dp)
    weight_bytes = sum(a.size * a.dtype.itemsize for a in padded)
    io_bytes = 2 * Bp * Dp * 2                           # bf16 x in + out
    cost = pl.CostEstimate(flops=flops,
                           transcendentals=Bp * Dp,      # tanh
                           bytes_accessed=weight_bytes + io_bytes)

    # VMEM budget: resident weights + double-buffered bf16 x/out tiles +
    # rough f32 layer intermediates, with 25% headroom (clamped).
    tile_bytes = 2 * 2 * block_b * Dp * 2
    act_bytes = 2 * block_b * max(H1p, Dp) * 4
    vmem_limit = min(max(32 << 20,
                         int(1.25 * (weight_bytes + tile_bytes + act_bytes))),
                     110 << 20)

    out_p = pl.pallas_call(
        _autoencoder_kernel,
        out_shape=jax.ShapeDtypeStruct((Bp, Dp), jnp.bfloat16),
        grid_spec=pltpu.PrefetchScalarGridSpec(
            num_scalar_prefetch=0,
            grid=(n_steps,),
            in_specs=in_specs,
            out_specs=out_spec,
        ),
        compiler_params=pltpu.CompilerParams(
            dimension_semantics=("parallel",),
            vmem_limit_bytes=vmem_limit,
        ),
        cost_estimate=cost,
    )(x_p, *padded)

    # Slice back to (B, D) and restore the caller's dtype (fuses into one op).
    return out_p[:B, :D].astype(x.dtype)


def init_params(key, input_dim):
    """Deterministic init matching nn.Linear shapes (weights stored transposed)."""
    inter1 = int(0.67 * input_dim)
    inter2 = int(0.33 * input_dim)
    dims = [(input_dim, inter1), (inter1, inter2), (inter2, inter1), (inter1, input_dim)]
    params = []
    for (fan_in, fan_out) in dims:
        key, kw, kb = jax.random.split(key, 3)
        bound = 1.0 / jnp.sqrt(fan_in)
        # PyTorch Linear weight is (out, in); we store the transpose (in, out).
        w = jax.random.uniform(kw, (fan_in, fan_out), jnp.float32, -bound, bound)
        b = jax.random.uniform(kb, (1, fan_out), jnp.float32, -bound, bound)
        params.append((w, b))
    return params


def reference_forward_f32(x, params):
    (w1, b1), (w2, b2), (w3, b3), (w4, b4) = params
    h = jax.nn.relu(x @ w1 + b1)
    h = jax.nn.relu(h @ w2 + b2)
    h = jax.nn.relu(h @ w3 + b3)
    return jnp.tanh(h @ w4 + b4)


def reference_forward_bf16(x, params):
    """Same bf16-operand / f32-accumulate math as the kernel, plain JAX."""
    def layer(h, w, b):
        return jnp.dot(h.astype(jnp.bfloat16), w.astype(jnp.bfloat16),
                       preferred_element_type=jnp.float32) + b
    (w1, b1), (w2, b2), (w3, b3), (w4, b4) = params
    h = jax.nn.relu(layer(x, w1, b1))
    h = jax.nn.relu(layer(h, w2, b2))
    h = jax.nn.relu(layer(h, w3, b3))
    return jnp.tanh(layer(h, w4, b4))


if __name__ == "__main__":
    key = jax.random.PRNGKey(0)
    batch = 16
    input_dim = 32            # -> inter1 = 21, inter2 = 10

    key, kx, kp = jax.random.split(key, 3)
    x = jax.random.normal(kx, (batch, input_dim), jnp.float32)
    params = init_params(kp, input_dim)

    prepared = prepare_params(params)     # one-time padded/bf16 weight pytree
    out = autoencoder_forward(x, prepared)
    out = jax.block_until_ready(out)
    assert out.shape == (batch, input_dim)

    ref_bf16 = reference_forward_bf16(x, params)
    ref_f32 = reference_forward_f32(x, params)
    # Kernel output is stored bf16 (tanh output in [-1, 1]), so allow bf16 eps.
    assert jnp.allclose(out, ref_bf16, atol=1e-2, rtol=1e-2), "mismatch vs bf16 reference"
    assert jnp.allclose(out, ref_f32, atol=5e-2, rtol=5e-2), "mismatch vs f32 reference"

    print("KERNEL_OK")
</pallas_src>

<mosaic_0001>
module attributes {stable_mosaic.version = 11 : i64} {
  func.func @_autoencoder_kernel(%arg0: i32, %arg1: memref<8x128xbf16, #tpu.memory_space<vmem>>, %arg2: memref<128x128xbf16, #tpu.memory_space<vmem>>, %arg3: memref<1x128xf32, #tpu.memory_space<vmem>>, %arg4: memref<128x128xbf16, #tpu.memory_space<vmem>>, %arg5: memref<1x128xf32, #tpu.memory_space<vmem>>, %arg6: memref<128x128xbf16, #tpu.memory_space<vmem>>, %arg7: memref<1x128xf32, #tpu.memory_space<vmem>>, %arg8: memref<128x128xbf16, #tpu.memory_space<vmem>>, %arg9: memref<1x128xf32, #tpu.memory_space<vmem>>, %arg10: memref<8x128xbf16, #tpu.memory_space<vmem>>) attributes {dimension_semantics = [#tpu.dimension_semantics<parallel>], iteration_bounds = array<i64: 2>, scalar_prefetch = 0 : i64, scratch_operands = 0 : i64, tpu.core_type = #tpu.core_type<tc>, window_params = [{transform_indices = @transform_0, window_bounds = array<i64: 8, 128>}, {pipeline_mode = #tpu.pipeline_mode<synchronous>, transform_indices = @transform_1, window_bounds = array<i64: 128, 128>}, {pipeline_mode = #tpu.pipeline_mode<synchronous>, transform_indices = @transform_2, window_bounds = array<i64: 1, 128>}, {pipeline_mode = #tpu.pipeline_mode<synchronous>, transform_indices = @transform_3, window_bounds = array<i64: 128, 128>}, {pipeline_mode = #tpu.pipeline_mode<synchronous>, transform_indices = @transform_4, window_bounds = array<i64: 1, 128>}, {pipeline_mode = #tpu.pipeline_mode<synchronous>, transform_indices = @transform_5, window_bounds = array<i64: 128, 128>}, {pipeline_mode = #tpu.pipeline_mode<synchronous>, transform_indices = @transform_6, window_bounds = array<i64: 1, 128>}, {pipeline_mode = #tpu.pipeline_mode<synchronous>, transform_indices = @transform_7, window_bounds = array<i64: 128, 128>}, {pipeline_mode = #tpu.pipeline_mode<synchronous>, transform_indices = @transform_8, window_bounds = array<i64: 1, 128>}, {transform_indices = @transform_9, window_bounds = array<i64: 8, 128>}]} {
    %c0 = arith.constant 0 : index
    %c0_0 = arith.constant 0 : index
    %0 = vector.load %arg1[%c0, %c0_0] : memref<8x128xbf16, #tpu.memory_space<vmem>>, vector<8x128xbf16>
    %c0_1 = arith.constant 0 : index
    %c0_2 = arith.constant 0 : index
    %1 = vector.load %arg2[%c0_1, %c0_2] : memref<128x128xbf16, #tpu.memory_space<vmem>>, vector<128x128xbf16>
    %cst = arith.constant dense<0.000000e+00> : vector<8x128xf32>
    %2 = tpu.matmul %0, %1, %cst {dimension_numbers = #tpu.dot_dimension_numbers<[1], [0], [0], [1], [0, 0, 1, 1], [], []>} : vector<8x128xbf16>, vector<128x128xbf16>, vector<8x128xf32> -> vector<8x128xf32>
    %c0_3 = arith.constant 0 : index
    %c0_4 = arith.constant 0 : index
    %3 = vector.load %arg3[%c0_3, %c0_4] : memref<1x128xf32, #tpu.memory_space<vmem>>, vector<1x128xf32>
    %4 = vector.broadcast %3 : vector<1x128xf32> to vector<8x128xf32>
    %5 = arith.addf %2, %4 : vector<8x128xf32>
    %cst_5 = arith.constant 0.000000e+00 : f32
    %6 = vector.broadcast %cst_5 : f32 to vector<8x128xf32>
    %7 = arith.maximumf %5, %6 : vector<8x128xf32>
    %8 = arith.truncf %7 : vector<8x128xf32> to vector<8x128xbf16>
    %c0_6 = arith.constant 0 : index
    %c0_7 = arith.constant 0 : index
    %9 = vector.load %arg4[%c0_6, %c0_7] : memref<128x128xbf16, #tpu.memory_space<vmem>>, vector<128x128xbf16>
    %cst_8 = arith.constant dense<0.000000e+00> : vector<8x128xf32>
    %10 = tpu.matmul %8, %9, %cst_8 {dimension_numbers = #tpu.dot_dimension_numbers<[1], [0], [0], [1], [0, 0, 1, 1], [], []>} : vector<8x128xbf16>, vector<128x128xbf16>, vector<8x128xf32> -> vector<8x128xf32>
    %c0_9 = arith.constant 0 : index
    %c0_10 = arith.constant 0 : index
    %11 = vector.load %arg5[%c0_9, %c0_10] : memref<1x128xf32, #tpu.memory_space<vmem>>, vector<1x128xf32>
    %12 = vector.broadcast %11 : vector<1x128xf32> to vector<8x128xf32>
    %13 = arith.addf %10, %12 : vector<8x128xf32>
    %cst_11 = arith.constant 0.000000e+00 : f32
    %14 = vector.broadcast %cst_11 : f32 to vector<8x128xf32>
    %15 = arith.maximumf %13, %14 : vector<8x128xf32>
    %16 = arith.truncf %15 : vector<8x128xf32> to vector<8x128xbf16>
    %c0_12 = arith.constant 0 : index
    %c0_13 = arith.constant 0 : index
    %17 = vector.load %arg6[%c0_12, %c0_13] : memref<128x128xbf16, #tpu.memory_space<vmem>>, vector<128x128xbf16>
    %cst_14 = arith.constant dense<0.000000e+00> : vector<8x128xf32>
    %18 = tpu.matmul %16, %17, %cst_14 {dimension_numbers = #tpu.dot_dimension_numbers<[1], [0], [0], [1], [0, 0, 1, 1], [], []>} : vector<8x128xbf16>, vector<128x128xbf16>, vector<8x128xf32> -> vector<8x128xf32>
    %c0_15 = arith.constant 0 : index
    %c0_16 = arith.constant 0 : index
    %19 = vector.load %arg7[%c0_15, %c0_16] : memref<1x128xf32, #tpu.memory_space<vmem>>, vector<1x128xf32>
    %20 = vector.broadcast %19 : vector<1x128xf32> to vector<8x128xf32>
    %21 = arith.addf %18, %20 : vector<8x128xf32>
    %cst_17 = arith.constant 0.000000e+00 : f32
    %22 = vector.broadcast %cst_17 : f32 to vector<8x128xf32>
    %23 = arith.maximumf %21, %22 : vector<8x128xf32>
    %24 = arith.truncf %23 : vector<8x128xf32> to vector<8x128xbf16>
    %c0_18 = arith.constant 0 : index
    %c0_19 = arith.constant 0 : index
    %25 = vector.load %arg8[%c0_18, %c0_19] : memref<128x128xbf16, #tpu.memory_space<vmem>>, vector<128x128xbf16>
    %cst_20 = arith.constant dense<0.000000e+00> : vector<8x128xf32>
    %26 = tpu.matmul %24, %25, %cst_20 {dimension_numbers = #tpu.dot_dimension_numbers<[1], [0], [0], [1], [0, 0, 1, 1], [], []>} : vector<8x128xbf16>, vector<128x128xbf16>, vector<8x128xf32> -> vector<8x128xf32>
    %c0_21 = arith.constant 0 : index
    %c0_22 = arith.constant 0 : index
    %27 = vector.load %arg9[%c0_21, %c0_22] : memref<1x128xf32, #tpu.memory_space<vmem>>, vector<1x128xf32>
    %28 = vector.broadcast %27 : vector<1x128xf32> to vector<8x128xf32>
    %29 = arith.addf %26, %28 : vector<8x128xf32>
    %30 = math.tanh %29 : vector<8x128xf32>
    %31 = arith.truncf %30 : vector<8x128xf32> to vector<8x128xbf16>
    %c0_23 = arith.constant 0 : index
    %c0_24 = arith.constant 0 : index
    %32 = vector.load %arg10[%c0_23, %c0_24] : memref<8x128xbf16, #tpu.memory_space<vmem>>, vector<8x128xbf16>
    tpu.vector_store %arg10[%c0_23, %c0_24], %31 {strides = array<i32>} : memref<8x128xbf16, #tpu.memory_space<vmem>>, vector<8x128xbf16>,
    return
  }
  func.func @transform_0(%arg0: i32) -> (i32, i32) {
    %c0_i32 = arith.constant 0 : i32
    %c0_i32_0 = arith.constant 0 : i32
    return %arg0, %c0_i32 : i32, i32
  }
  func.func @transform_1(%arg0: i32) -> (i32, i32) {
    %c0_i32 = arith.constant 0 : i32
    %c0_i32_0 = arith.constant 0 : i32
    %c0_i32_1 = arith.constant 0 : i32
    return %c0_i32, %c0_i32_0 : i32, i32
  }
  func.func @transform_2(%arg0: i32) -> (i32, i32) {
    %c0_i32 = arith.constant 0 : i32
    %c0_i32_0 = arith.constant 0 : i32
    %c0_i32_1 = arith.constant 0 : i32
    return %c0_i32, %c0_i32_0 : i32, i32
  }
  func.func @transform_3(%arg0: i32) -> (i32, i32) {
    %c0_i32 = arith.constant 0 : i32
    %c0_i32_0 = arith.constant 0 : i32
    %c0_i32_1 = arith.constant 0 : i32
    return %c0_i32, %c0_i32_0 : i32, i32
  }
  func.func @transform_4(%arg0: i32) -> (i32, i32) {
    %c0_i32 = arith.constant 0 : i32
    %c0_i32_0 = arith.constant 0 : i32
    %c0_i32_1 = arith.constant 0 : i32
    return %c0_i32, %c0_i32_0 : i32, i32
  }
  func.func @transform_5(%arg0: i32) -> (i32, i32) {
    %c0_i32 = arith.constant 0 : i32
    %c0_i32_0 = arith.constant 0 : i32
    %c0_i32_1 = arith.constant 0 : i32
    return %c0_i32, %c0_i32_0 : i32, i32
  }
  func.func @transform_6(%arg0: i32) -> (i32, i32) {
    %c0_i32 = arith.constant 0 : i32
    %c0_i32_0 = arith.constant 0 : i32
    %c0_i32_1 = arith.constant 0 : i32
    return %c0_i32, %c0_i32_0 : i32, i32
  }
  func.func @transform_7(%arg0: i32) -> (i32, i32) {
    %c0_i32 = arith.constant 0 : i32
    %c0_i32_0 = arith.constant 0 : i32
    %c0_i32_1 = arith.constant 0 : i32
    return %c0_i32, %c0_i32_0 : i32, i32
  }
  func.func @transform_8(%arg0: i32) -> (i32, i32) {
    %c0_i32 = arith.constant 0 : i32
    %c0_i32_0 = arith.constant 0 : i32
    %c0_i32_1 = arith.constant 0 : i32
    return %c0_i32, %c0_i32_0 : i32, i32
  }
  func.func @transform_9(%arg0: i32) -> (i32, i32) {
    %c0_i32 = arith.constant 0 : i32
    %c0_i32_0 = arith.constant 0 : i32
    return %arg0, %c0_i32 : i32, i32
  }
}

</mosaic_0001>

<llo_original>
// kernel: tpu_custom_call.1
$region0: #{tpu_custom_call.1}
  #allocation0 [shape = 'u32[]', space=smem, size = 0x4, offset = 0x4, fixed_abs, tag = 'smem constant byte address 0x4 - core index']
  #allocation1 [shape = 'u32[144,128]{1,0:T(1,128)}', space=vmem, size = 0x12000, scoped, tag = 'internal scratch']
  %s0 = inlined_call_operand.hbm [shape: bf16[16,128], index: 0, kind: input, shape index: {}]
  %s1 = inlined_call_operand.hbm [shape: bf16[128,128], index: 1, kind: input, shape index: {}]
  %s2 = inlined_call_operand.vmem [shape: f32[1,128], index: 2, kind: input, shape index: {}]
  %s3 = inlined_call_operand.hbm [shape: bf16[128,128], index: 3, kind: input, shape index: {}]
  %s4 = inlined_call_operand.vmem [shape: f32[1,128], index: 4, kind: input, shape index: {}]
  %s5 = inlined_call_operand.hbm [shape: bf16[128,128], index: 5, kind: input, shape index: {}]
  %s6 = inlined_call_operand.vmem [shape: f32[1,128], index: 6, kind: input, shape index: {}]
  %s7 = inlined_call_operand.hbm [shape: bf16[128,128], index: 7, kind: input, shape index: {}]
  %s8 = inlined_call_operand.vmem [shape: f32[1,128], index: 8, kind: input, shape index: {}]
  %s9 = inlined_call_operand.hbm [shape: bf16[16,128], index: 9, kind: output, shape index: {}]
  %s10 = sld [smem:[#allocation0]]
  $region89: #{tpu_custom_call.1} parent=0
    _
  %s12 = ssub.s32 1, %s10
  %s13 = scalar_select 0, %s12, %s10
  $region1: #{tpu_custom_call.1} parent=0
    #allocation2 [shape = 'u8[4096]{0}', space=vmem, size = 0x1000, scoped, tag = 'input window, operand 0']
    #allocation3 [shape = 's32[2]{0}', space=sflag, size = 0x8, scoped, tag = 'scoped memory for tpu_custom_call.1']
    #allocation4 [shape = 's32[2]{0}', space=sflag, size = 0x8, scoped, tag = 'scoped memory for tpu_custom_call.1']
    #allocation5 [shape = 'u8[32768]{0}', space=vmem, size = 0x8000, scoped, tag = 'input window, operand 1, single buffered']
    #allocation6 [shape = 's32[1]{0}', space=sflag, size = 0x4, scoped, tag = 'scoped memory for tpu_custom_call.1']
    #allocation7 [shape = 'u8[32768]{0}', space=vmem, size = 0x8000, scoped, tag = 'input window, operand 3, single buffered']
    #allocation8 [shape = 'u8[32768]{0}', space=vmem, size = 0x8000, scoped, tag = 'input window, operand 5, single buffered']
    #allocation9 [shape = 's32[1]{0}', space=sflag, size = 0x4, scoped, tag = 'scoped memory for tpu_custom_call.1']
    #allocation10 [shape = 'u8[32768]{0}', space=vmem, size = 0x8000, scoped, tag = 'input window, operand 7, single buffered']
    #allocation11 [shape = 'u8[4096]{0}', space=vmem, size = 0x1000, scoped, tag = 'output window, operand 0']
    %14 = vsyncpa [#allocation3], 0
    %s15 = scalar_lea.sflag [#allocation3], 1
    %16 = vsyncpa %s15, 0
    %17 = vsyncpa [#allocation6], 0
    %18 = vsyncpa [#allocation9], 0
    %19 = vsyncpa [#allocation4], 0
    %s20 = scalar_lea.sflag [#allocation4], 1
    %21 = vsyncpa %s20, 0
    loop: start=0, step=1, limit=4
    $region2: #{tpu_custom_call.1} parent=1 // loop_pre_header
      _
    $region3: #{tpu_custom_call.1} parent=1 // loop_header
      %s23 = sphi 0, %s27
      %p24 = scmp.ge.s32.totalorder %s23, 4
      %s33 = sphi 0, %s35
      %s36 = sphi 0, %s33
      %s37 = sphi 0, %s36
      %s53 = sphi 0, %s37
      %s57 = sphi 0, %s57
      %s59 = sphi 0, %s57
      %s60 = sphi 0, %s59
      %s74 = sphi 0, %s60
      %s78 = sphi 0, %s78
      %s80 = sphi 0, %s78
      %s81 = sphi 0, %s80
      %s95 = sphi 0, %s81
      %s99 = sphi 0, %s99
      %s101 = sphi 0, %s99
      %s102 = sphi 0, %s101
      %s116 = sphi 0, %s102
      %s120 = sphi 0, %s120
      %s122 = sphi 0, %s120
      %s123 = sphi 0, %s122
      %s137 = sphi 0, %s123
      %s141 = sphi 0, %s141
      %s143 = sphi 0, %s141
      %s144 = sphi 0, %s143
      %s158 = sphi 0, %s144
      %s162 = sphi 0, %s162
      %s164 = sphi 0, %s162
      %s165 = sphi 0, %s164
      %s179 = sphi 0, %s165
      %s183 = sphi 0, %s183
      %s185 = sphi 0, %s183
      %s186 = sphi 0, %s185
      %s200 = sphi 0, %s186
      %s204 = sphi 0, %s204
      %s206 = sphi 0, %s204
      %s207 = sphi 0, %s206
      %s221 = sphi 0, %s207
      %s227 = sphi 0, %s229
      %s230 = sphi 0, %s227
      %s231 = sphi 0, %s230
      %s247 = sphi 0, %s231
    $region4: #{tpu_custom_call.1} parent=1 // loop_header_branch
      %26 = sbr.rel (%p24) target = $region8
    $region5: #{tpu_custom_call.1} parent=1 // loop_body
      %s28 = ssub.s32 %s23, 1
      %s29 = ssub.s32 %s23, 2
      %s30 = sadd.s32 %s23, 1
      %s31 = ssub.s32 %s23, %s30
      %p32 = scmp.eq.s32.totalorder %s31, 0
      %s34 = sadd.s32 %s33, 1
      %s35 = scalar_select %p32, %s33, %s34
      %p38 = pneg %p32
      %p39 = scmp.eq.s32.totalorder %s23, 1
      %p40 = por %p38, %p39
      %p41 = scmp.ne.s32.totalorder %s33, %s36
      %p42 = scmp.eq.s32.totalorder %s23, 0
      %p43 = por %p41, %p42
      %p44 = scmp.ne.s32.totalorder %s33, %s36
      %p45 = scmp.eq.s32.totalorder %s28, 1
      %p46 = por %p44, %p45
      %p47 = scmp.ne.s32.totalorder %s36, %s37
      %p48 = scmp.eq.s32.totalorder %s28, 0
      %p49 = por %p47, %p48
      %p50 = scmp.ne.s32.totalorder %s36, %s37
      %p51 = scmp.eq.s32.totalorder %s29, 1
      %p52 = por %p50, %p51
      %p54 = scmp.ne.s32.totalorder %s37, %s53
      %p55 = scmp.eq.s32.totalorder %s29, 0
      %p56 = por %p54, %p55
      %s58 = sadd.s32 %s57, 1
      %p61 = scmp.eq.s32.totalorder %s23, 1
      %p62 = scmp.ne.s32.totalorder %s57, %s59
      %p63 = scmp.eq.s32.totalorder %s23, 0
      %p64 = por %p62, %p63
      %p65 = scmp.ne.s32.totalorder %s57, %s59
      %p66 = scmp.eq.s32.totalorder %s28, 1
      %p67 = por %p65, %p66
      %p68 = scmp.ne.s32.totalorder %s59, %s60
      %p69 = scmp.eq.s32.totalorder %s28, 0
      %p70 = por %p68, %p69
      %p71 = scmp.ne.s32.totalorder %s59, %s60
      %p72 = scmp.eq.s32.totalorder %s29, 1
      %p73 = por %p71, %p72
      %p75 = scmp.ne.s32.totalorder %s60, %s74
      %p76 = scmp.eq.s32.totalorder %s29, 0
      %p77 = por %p75, %p76
      %s79 = sadd.s32 %s78, 1
      %p82 = scmp.eq.s32.totalorder %s23, 1
      %p83 = scmp.ne.s32.totalorder %s78, %s80
      %p84 = scmp.eq.s32.totalorder %s23, 0
      %p85 = por %p83, %p84
      %p86 = scmp.ne.s32.totalorder %s78, %s80
      %p87 = scmp.eq.s32.totalorder %s28, 1
      %p88 = por %p86, %p87
      %p89 = scmp.ne.s32.totalorder %s80, %s81
      %p90 = scmp.eq.s32.totalorder %s28, 0
      %p91 = por %p89, %p90
      %p92 = scmp.ne.s32.totalorder %s80, %s81
      %p93 = scmp.eq.s32.totalorder %s29, 1
      %p94 = por %p92, %p93
      %p96 = scmp.ne.s32.totalorder %s81, %s95
      %p97 = scmp.eq.s32.totalorder %s29, 0
      %p98 = por %p96, %p97
      %s100 = sadd.s32 %s99, 1
      %p103 = scmp.eq.s32.totalorder %s23, 1
      %p104 = scmp.ne.s32.totalorder %s99, %s101
      %p105 = scmp.eq.s32.totalorder %s23, 0
      %p106 = por %p104, %p105
      %p107 = scmp.ne.s32.totalorder %s99, %s101
      %p108 = scmp.eq.s32.totalorder %s28, 1
      %p109 = por %p107, %p108
      %p110 = scmp.ne.s32.totalorder %s101, %s102
      %p111 = scmp.eq.s32.totalorder %s28, 0
      %p112 = por %p110, %p111
      %p113 = scmp.ne.s32.totalorder %s101, %s102
      %p114 = scmp.eq.s32.totalorder %s29, 1
      %p115 = por %p113, %p114
      %p117 = scmp.ne.s32.totalorder %s102, %s116
      %p118 = scmp.eq.s32.totalorder %s29, 0
      %p119 = por %p117, %p118
      %s121 = sadd.s32 %s120, 1
      %p124 = scmp.eq.s32.totalorder %s23, 1
      %p125 = scmp.ne.s32.totalorder %s120, %s122
      %p126 = scmp.eq.s32.totalorder %s23, 0
      %p127 = por %p125, %p126
      %p128 = scmp.ne.s32.totalorder %s120, %s122
      %p129 = scmp.eq.s32.totalorder %s28, 1
      %p130 = por %p128, %p129
      %p131 = scmp.ne.s32.totalorder %s122, %s123
      %p132 = scmp.eq.s32.totalorder %s28, 0
      %p133 = por %p131, %p132
      %p134 = scmp.ne.s32.totalorder %s122, %s123
      %p135 = scmp.eq.s32.totalorder %s29, 1
      %p136 = por %p134, %p135
      %p138 = scmp.ne.s32.totalorder %s123, %s137
      %p139 = scmp.eq.s32.totalorder %s29, 0
      %p140 = por %p138, %p139
      %s142 = sadd.s32 %s141, 1
      %p145 = scmp.eq.s32.totalorder %s23, 1
      %p146 = scmp.ne.s32.totalorder %s141, %s143
      %p147 = scmp.eq.s32.totalorder %s23, 0
      %p148 = por %p146, %p147
      %p149 = scmp.ne.s32.totalorder %s141, %s143
      %p150 = scmp.eq.s32.totalorder %s28, 1
      %p151 = por %p149, %p150
      %p152 = scmp.ne.s32.totalorder %s143, %s144
      %p153 = scmp.eq.s32.totalorder %s28, 0
      %p154 = por %p152, %p153
      %p155 = scmp.ne.s32.totalorder %s143, %s144
      %p156 = scmp.eq.s32.totalorder %s29, 1
      %p157 = por %p155, %p156
      %p159 = scmp.ne.s32.totalorder %s144, %s158
      %p160 = scmp.eq.s32.totalorder %s29, 0
      %p161 = por %p159, %p160
      %s163 = sadd.s32 %s162, 1
      %p166 = scmp.eq.s32.totalorder %s23, 1
      %p167 = scmp.ne.s32.totalorder %s162, %s164
      %p168 = scmp.eq.s32.totalorder %s23, 0
      %p169 = por %p167, %p168
      %p170 = scmp.ne.s32.totalorder %s162, %s164
      %p171 = scmp.eq.s32.totalorder %s28, 1
      %p172 = por %p170, %p171
      %p173 = scmp.ne.s32.totalorder %s164, %s165
      %p174 = scmp.eq.s32.totalorder %s28, 0
      %p175 = por %p173, %p174
      %p176 = scmp.ne.s32.totalorder %s164, %s165
      %p177 = scmp.eq.s32.totalorder %s29, 1
      %p178 = por %p176, %p177
      %p180 = scmp.ne.s32.totalorder %s165, %s179
      %p181 = scmp.eq.s32.totalorder %s29, 0
      %p182 = por %p180, %p181
      %s184 = sadd.s32 %s183, 1
      %p187 = scmp.eq.s32.totalorder %s23, 1
      %p188 = scmp.ne.s32.totalorder %s183, %s185
      %p189 = scmp.eq.s32.totalorder %s23, 0
      %p190 = por %p188, %p189
      %p191 = scmp.ne.s32.totalorder %s183, %s185
      %p192 = scmp.eq.s32.totalorder %s28, 1
      %p193 = por %p191, %p192
      %p194 = scmp.ne.s32.totalorder %s185, %s186
      %p195 = scmp.eq.s32.totalorder %s28, 0
      %p196 = por %p194, %p195
      %p197 = scmp.ne.s32.totalorder %s185, %s186
      %p198 = scmp.eq.s32.totalorder %s29, 1
      %p199 = por %p197, %p198
      %p201 = scmp.ne.s32.totalorder %s186, %s200
      %p202 = scmp.eq.s32.totalorder %s29, 0
      %p203 = por %p201, %p202
      %s205 = sadd.s32 %s204, 1
      %p208 = scmp.eq.s32.totalorder %s23, 1
      %p209 = scmp.ne.s32.totalorder %s204, %s206
      %p210 = scmp.eq.s32.totalorder %s23, 0
      %p211 = por %p209, %p210
      %p212 = scmp.ne.s32.totalorder %s204, %s206
      %p213 = scmp.eq.s32.totalorder %s28, 1
      %p214 = por %p212, %p213
      %p215 = scmp.ne.s32.totalorder %s206, %s207
      %p216 = scmp.eq.s32.totalorder %s28, 0
      %p217 = por %p215, %p216
      %p218 = scmp.ne.s32.totalorder %s206, %s207
      %p219 = scmp.eq.s32.totalorder %s29, 1
      %p220 = por %p218, %p219
      %p222 = scmp.ne.s32.totalorder %s207, %s221
      %p223 = scmp.eq.s32.totalorder %s29, 0
      %p224 = por %p222, %p223
      %s225 = ssub.s32 %s23, %s30
      %p226 = scmp.eq.s32.totalorder %s225, 0
      %s228 = sadd.s32 %s227, 1
      %s229 = scalar_select %p226, %s227, %s228
      %p232 = pneg %p226
      %p233 = scmp.eq.s32.totalorder %s23, 1
      %p234 = por %p232, %p233
      %p235 = scmp.ne.s32.totalorder %s227, %s230
      %p236 = scmp.eq.s32.totalorder %s23, 0
      %p237 = por %p235, %p236
      %p238 = scmp.ne.s32.totalorder %s227, %s230
      %p239 = scmp.eq.s32.totalorder %s28, 1
      %p240 = por %p238, %p239
      %p241 = scmp.ne.s32.totalorder %s230, %s231
      %p242 = scmp.eq.s32.totalorder %s28, 0
      %p243 = por %p241, %p242
      %p244 = scmp.ne.s32.totalorder %s230, %s231
      %p245 = scmp.eq.s32.totalorder %s29, 1
      %p246 = por %p244, %p245
      %p248 = scmp.ne.s32.totalorder %s231, %s247
      %p249 = scmp.eq.s32.totalorder %s29, 0
      %p250 = por %p248, %p249
      %p251 = scmp.le.s32.totalorder 1, %s23
      %p252 = scmp.lt.s32.totalorder %s23, 3
      %p253 = pnand %p251, %p252
      %p254 = pneg %p253
      // Predicated region
      $region9: #{tpu_custom_call.1} parent=5 // pred_check
        _
      $region10: #{tpu_custom_call.1} parent=5 // pred_check_branch
        %256 = sbr.rel (%p253) target = $region12
      $region11: #{tpu_custom_call.1} parent=5 // pred_region
        %s257 = ssub.s32 %s23, 1
        // Predicated region
        $region13: #{tpu_custom_call.1} parent=11 // pred_check
          %p258 = pneg %p70
        $region14: #{tpu_custom_call.1} parent=11 // pred_check_branch
          %260 = sbr.rel (%p258) target = $region16
        $region15: #{tpu_custom_call.1} parent=11 // pred_region
          %s262 = ssub.s32 1024, 1024
          %263 = vsyncadd [#allocation6], %s262
          %s264 = sshll.u32 [#allocation5], 4
          %s265 = int_to_ptr.vmem [resolvable:$true] %s264
          %270 = dma.hbm_to_vmem [thread:$0]  %s1, 1024, %s265, [#allocation6], 64, 64, 4
        $region16: #{tpu_custom_call.1} parent=11 // pred_fallthru
          _
        // Predicated region
        $region17: #{tpu_custom_call.1} parent=11 // pred_check
          %p271 = pneg %p91
        $region18: #{tpu_custom_call.1} parent=11 // pred_check_branch
          %273 = sbr.rel (%p271) target = $region20
        $region19: #{tpu_custom_call.1} parent=11 // pred_region
          _
        $region20: #{tpu_custom_call.1} parent=11 // pred_fallthru
          _
        // Predicated region
        $region21: #{tpu_custom_call.1} parent=11 // pred_check
          %p274 = pneg %p112
        $region22: #{tpu_custom_call.1} parent=11 // pred_check_branch
          %276 = sbr.rel (%p274) target = $region24
        $region23: #{tpu_custom_call.1} parent=11 // pred_region
          %s278 = ssub.s32 1024, 1024
          %279 = vsyncadd [#allocation6], %s278
          %s280 = sshll.u32 [#allocation7], 4
          %s281 = int_to_ptr.vmem [resolvable:$true] %s280
          %286 = dma.hbm_to_vmem [thread:$0]  %s3, 1024, %s281, [#allocation6], 64, 64, 4
        $region24: #{tpu_custom_call.1} parent=11 // pred_fallthru
          _
        // Predicated region
        $region25: #{tpu_custom_call.1} parent=11 // pred_check
          %p287 = pneg %p133
        $region26: #{tpu_custom_call.1} parent=11 // pred_check_branch
          %289 = sbr.rel (%p287) target = $region28
        $region27: #{tpu_custom_call.1} parent=11 // pred_region
          _
        $region28: #{tpu_custom_call.1} parent=11 // pred_fallthru
          _
        // Predicated region
        $region29: #{tpu_custom_call.1} parent=11 // pred_check
          %p290 = pneg %p154
        $region30: #{tpu_custom_call.1} parent=11 // pred_check_branch
          %292 = sbr.rel (%p290) target = $region32
        $region31: #{tpu_custom_call.1} parent=11 // pred_region
          %s294 = ssub.s32 1024, 1024
          %295 = vsyncadd [#allocation9], %s294
          %s296 = sshll.u32 [#allocation8], 4
          %s297 = int_to_ptr.vmem [resolvable:$true] %s296
          %302 = dma.hbm_to_vmem [thread:$0]  %s5, 1024, %s297, [#allocation9], 64, 64, 4
        $region32: #{tpu_custom_call.1} parent=11 // pred_fallthru
          _
        // Predicated region
        $region33: #{tpu_custom_call.1} parent=11 // pred_check
          %p303 = pneg %p175
        $region34: #{tpu_custom_call.1} parent=11 // pred_check_branch
          %305 = sbr.rel (%p303) target = $region36
        $region35: #{tpu_custom_call.1} parent=11 // pred_region
          _
        $region36: #{tpu_custom_call.1} parent=11 // pred_fallthru
          _
        // Predicated region
        $region37: #{tpu_custom_call.1} parent=11 // pred_check
          %p306 = pneg %p196
        $region38: #{tpu_custom_call.1} parent=11 // pred_check_branch
          %308 = sbr.rel (%p306) target = $region40
        $region39: #{tpu_custom_call.1} parent=11 // pred_region
          %s310 = ssub.s32 1024, 1024
          %311 = vsyncadd [#allocation9], %s310
          %s312 = sshll.u32 [#allocation10], 4
          %s313 = int_to_ptr.vmem [resolvable:$true] %s312
          %318 = dma.hbm_to_vmem [thread:$0]  %s7, 1024, %s313, [#allocation9], 64, 64, 4
        $region40: #{tpu_custom_call.1} parent=11 // pred_fallthru
          _
        // Predicated region
        $region41: #{tpu_custom_call.1} parent=11 // pred_check
          %p319 = pneg %p217
        $region42: #{tpu_custom_call.1} parent=11 // pred_check_branch
          %321 = sbr.rel (%p319) target = $region44
        $region43: #{tpu_custom_call.1} parent=11 // pred_region
          _
        $region44: #{tpu_custom_call.1} parent=11 // pred_fallthru
          _
      $region12: #{tpu_custom_call.1} parent=5 // pred_fallthru
        _
      %p322 = scmp.lt.s32.totalorder %s23, 2
      // Predicated region
      $region45: #{tpu_custom_call.1} parent=5 // pred_check
        %p323 = pneg %p322
      $region46: #{tpu_custom_call.1} parent=5 // pred_check_branch
        %325 = sbr.rel (%p323) target = $region48
      $region47: #{tpu_custom_call.1} parent=5 // pred_region
        // Predicated region
        $region49: #{tpu_custom_call.1} parent=47 // pred_check
          %p326 = pneg %p43
        $region50: #{tpu_custom_call.1} parent=47 // pred_check_branch
          %328 = sbr.rel (%p326) target = $region52
        $region51: #{tpu_custom_call.1} parent=47 // pred_region
          %s329 = sand.u32 %s33, 1
          %s330 = scalar_lea.sflag [#allocation3], %s329
          %s331 = sand.u32 %s33, 1
          %s332 = smul.addr %s331, 4
          %s333 = scalar_lea.vmem [#allocation2], %s332
          %s335 = ssub.s32 64, 64
          %336 = vsyncadd %s330, %s335
          %s337 = smul.addr %s23, 64
          %s338 = scalar_lea.hbm %s0, %s337
          %s340 = sshll.u32 %s333, 4
          %s341 = int_to_ptr.vmem [resolvable:$true] %s340
          %343 = dma.hbm_to_vmem [thread:$0]  %s338, 64, %s341, %s330
        $region52: #{tpu_custom_call.1} parent=47 // pred_fallthru
          _
      $region48: #{tpu_custom_call.1} parent=5 // pred_fallthru
        _
      %p344 = scmp.le.s32.totalorder 1, %s23
      %p345 = scmp.lt.s32.totalorder %s23, 3
      %p346 = pnand %p344, %p345
      %p347 = pneg %p346
      // Predicated region
      $region53: #{tpu_custom_call.1} parent=5 // pred_check
        _
      $region54: #{tpu_custom_call.1} parent=5 // pred_check_branch
        %349 = sbr.rel (%p346) target = $region56
      $region55: #{tpu_custom_call.1} parent=5 // pred_region
        %s350 = ssub.s32 %s23, 1
        %s351 = sand.u32 %s36, 1
        %s352 = scalar_lea.sflag [#allocation3], %s351
        %s353 = sand.u32 %s36, 1
        %s354 = smul.addr %s353, 4
        %s355 = scalar_lea.vmem [#allocation2], %s354
        // Predicated region
        $region57: #{tpu_custom_call.1} parent=55 // pred_check
          %p356 = pneg %p49
        $region58: #{tpu_custom_call.1} parent=55 // pred_check_branch
          %358 = sbr.rel (%p356) target = $region60
        $region59: #{tpu_custom_call.1} parent=55 // pred_region
          %359 = dma.done %s352, 64
        $region60: #{tpu_custom_call.1} parent=55 // pred_fallthru
          _
        // Predicated region
        $region61: #{tpu_custom_call.1} parent=55 // pred_check
          %p360 = pneg %p70
        $region62: #{tpu_custom_call.1} parent=55 // pred_check_branch
          %362 = sbr.rel (%p360) target = $region64
        $region63: #{tpu_custom_call.1} parent=55 // pred_region
          %363 = dma.done [#allocation6], 1024
        $region64: #{tpu_custom_call.1} parent=55 // pred_fallthru
          _
        // Predicated region
        $region65: #{tpu_custom_call.1} parent=55 // pred_check
          %p364 = pneg %p112
        $region66: #{tpu_custom_call.1} parent=55 // pred_check_branch
          %366 = sbr.rel (%p364) target = $region68
        $region67: #{tpu_custom_call.1} parent=55 // pred_region
          %367 = dma.done [#allocation6], 1024
        $region68: #{tpu_custom_call.1} parent=55 // pred_fallthru
          _
        // Predicated region
        $region69: #{tpu_custom_call.1} parent=55 // pred_check
          %p368 = pneg %p154
        $region70: #{tpu_custom_call.1} parent=55 // pred_check_branch
          %370 = sbr.rel (%p368) target = $region72
        $region71: #{tpu_custom_call.1} parent=55 // pred_region
          %371 = dma.done [#allocation9], 1024
        $region72: #{tpu_custom_call.1} parent=55 // pred_fallthru
          _
        // Predicated region
        $region73: #{tpu_custom_call.1} parent=55 // pred_check
          %p372 = pneg %p196
        $region74: #{tpu_custom_call.1} parent=55 // pred_check_branch
          %374 = sbr.rel (%p372) target = $region76
        $region75: #{tpu_custom_call.1} parent=55 // pred_region
          %375 = dma.done [#allocation9], 1024
        $region76: #{tpu_custom_call.1} parent=55 // pred_fallthru
          _
        %s376 = sand.u32 %s36, 1
        %s377 = scalar_lea.sflag [#allocation3], %s376
        %s378 = sand.u32 %s36, 1
        %s379 = smul.addr %s378, 4
        %s380 = scalar_lea.vmem [#allocation2], %s379
        %p381 = pneg %p49
        %p382 = pneg %p46
        %p383 = pneg %p70
        %p384 = pneg %p67
        %p385 = pneg %p91
        %p386 = pneg %p88
        %p387 = pneg %p112
        %p388 = pneg %p109
        %p389 = pneg %p133
        %p390 = pneg %p130
        %p391 = pneg %p154
        %p392 = pneg %p151
        %p393 = pneg %p175
        %p394 = pneg %p172
        %p395 = pneg %p196
        %p396 = pneg %p193
        %p397 = pneg %p217
        %p398 = pneg %p214
        %p399 = pneg %p243
        %p400 = pneg %p240
        %s401 = sand.u32 %s230, 1
        %s402 = scalar_lea.sflag [#allocation4], %s401
        %s403 = sand.u32 %s230, 1
        %s404 = smul.addr %s403, 4
        %s405 = scalar_lea.vmem [#allocation11], %s404
        %v407 = vld [vmem:[%s355] sm:$0xf]
        %v408 = vld [vmem:[#allocation5] sm:$0xf]
        %v409 = vld [vmem:[#allocation5 + $0x4] sm:$0xf]
        %v410 = vld [vmem:[#allocation5 + $0x8] sm:$0xf]
        %v411 = vld [vmem:[#allocation5 + $0xc] sm:$0xf]
        %v412 = vld [vmem:[#allocation5 + $0x10] sm:$0xf]
        %v413 = vld [vmem:[#allocation5 + $0x14] sm:$0xf]
        %v414 = vld [vmem:[#allocation5 + $0x18] sm:$0xf]
        %v415 = vld [vmem:[#allocation5 + $0x1c] sm:$0xf]
        %v416 = vld [vmem:[#allocation5 + $0x20] sm:$0xf]
        %v417 = vld [vmem:[#allocation5 + $0x24] sm:$0xf]
        %v418 = vld [vmem:[#allocation5 + $0x28] sm:$0xf]
        %v419 = vld [vmem:[#allocation5 + $0x2c] sm:$0xf]
        %v420 = vld [vmem:[#allocation5 + $0x30] sm:$0xf]
        %v421 = vld [vmem:[#allocation5 + $0x34] sm:$0xf]
        %v422 = vld [vmem:[#allocation5 + $0x38] sm:$0xf]
        %v423 = vld [vmem:[#allocation5 + $0x3c] sm:$0xf]
        %v424 = vld [vmem:[%s2] sm:$0x1]
        %v426 = vlaneseq
        %v427 = vshrl.u32 %v426, 7
        %v428 = vsub.s32 0, %v427
        %v429 = vrot.slane %v424, %v428
        %v447 = vunpack.c.l.b16 %v408
        %v448 = vunpack.c.l.b16 %v409
        %v449 = vunpack.c.l.b16 %v410
        %v450 = vunpack.c.l.b16 %v411
        %v451 = vunpack.c.l.b16 %v412
        %v452 = vunpack.c.l.b16 %v413
        %v453 = vunpack.c.l.b16 %v414
        %v454 = vunpack.c.l.b16 %v415
        %v455 = vunpack.c.l.b16 %v416
        %v456 = vunpack.c.l.b16 %v417
        %v457 = vunpack.c.l.b16 %v418
        %v458 = vunpack.c.l.b16 %v419
        %v459 = vunpack.c.l.b16 %v420
        %v460 = vunpack.c.l.b16 %v421
        %v461 = vunpack.c.l.b16 %v422
        %v462 = vunpack.c.l.b16 %v423
        %v463 = vpack.c.b16 %v448, %v447
        %v464 = vpack.c.b16 %v450, %v449
        %v465 = vpack.c.b16 %v452, %v451
        %v466 = vpack.c.b16 %v454, %v453
        %v467 = vpack.c.b16 %v456, %v455
        %v468 = vpack.c.b16 %v458, %v457
        %v469 = vpack.c.b16 %v460, %v459
        %v470 = vpack.c.b16 %v462, %v461
        %479 = vmatprep.subr.bf16.mxu0 0
        %480 = vmatpush1.bf16.msra.mxu0 %v470
        %481 = vmatprep.subr.bf16.mxu0 0
        %482 = vmatpush1.bf16.msra.mxu0 %v469
        %483 = vmatprep.subr.bf16.mxu0 0
        %484 = vmatpush1.bf16.msra.mxu0 %v468
        %485 = vmatprep.subr.bf16.mxu0 0
        %486 = vmatpush1.bf16.msra.mxu0 %v467
        %487 = vmatprep.subr.bf16.mxu0 0
        %488 = vmatpush1.bf16.msra.mxu0 %v466
        %489 = vmatprep.subr.bf16.mxu0 0
        %490 = vmatpush1.bf16.msra.mxu0 %v465
        %491 = vmatprep.subr.bf16.mxu0 0
        %492 = vmatpush1.bf16.msra.mxu0 %v464
        %493 = vmatprep.subr.bf16.mxu0 0
        %494 = vmatpush1.bf16.msra.mxu0 %v463
        %495 = vmatprep.subr.bf16.mxu0 0
        %496 = vmatpush2.bf16.msra.mxu0 0
        %497 = vmatprep.subr.bf16.mxu0 0
        %498 = vmatpush2.bf16.msra.mxu0 0
        %499 = vmatprep.subr.bf16.mxu0 0
        %500 = vmatpush2.bf16.msra.mxu0 0
        %501 = vmatprep.subr.bf16.mxu0 0
        %502 = vmatpush2.bf16.msra.mxu0 0
        %503 = vmatprep.subr.bf16.mxu0 0
        %504 = vmatpush2.bf16.msra.mxu0 0
        %505 = vmatprep.subr.bf16.mxu0 0
        %506 = vmatpush2.bf16.msra.mxu0 0
        %507 = vmatprep.subr.bf16.mxu0 0
        %508 = vmatpush2.bf16.msra.mxu0 0
        %509 = vmatprep.subr.bf16.mxu0 0
        %510 = vmatpush2.bf16.msra.mxu0 0
        %511 = vmatprep.mubr.bf16.mxu0 0
        %512 = vmatmul.mubr.bf16.gmra.mxu0 %v407
        %v513 = vpop.f32.mrf.mxu0
        %v514 = vadd.f32 %v429, %v513
        %v515 = vpop.f32.mrf.mxu0
        %v516 = vpop.f32.mrf.mxu0
        %v517 = vpop.f32.mrf.mxu0
        %518 = vdwg.mxu0
        %v519 = vmax.f32 %v514, 0.0
        %v520 = vpack.c.bf16 %v519, %v519
        %v521 = vld [vmem:[#allocation7] sm:$0xf]
        %v522 = vld [vmem:[#allocation7 + $0x4] sm:$0xf]
        %v523 = vld [vmem:[#allocation7 + $0x8] sm:$0xf]
        %v524 = vld [vmem:[#allocation7 + $0xc] sm:$0xf]
        %v525 = vld [vmem:[#allocation7 + $0x10] sm:$0xf]
        %v526 = vld [vmem:[#allocation7 + $0x14] sm:$0xf]
        %v527 = vld [vmem:[#allocation7 + $0x18] sm:$0xf]
        %v528 = vld [vmem:[#allocation7 + $0x1c] sm:$0xf]
        %v529 = vld [vmem:[#allocation7 + $0x20] sm:$0xf]
        %v530 = vld [vmem:[#allocation7 + $0x24] sm:$0xf]
        %v531 = vld [vmem:[#allocation7 + $0x28] sm:$0xf]
        %v532 = vld [vmem:[#allocation7 + $0x2c] sm:$0xf]
        %v533 = vld [vmem:[#allocation7 + $0x30] sm:$0xf]
        %v534 = vld [vmem:[#allocation7 + $0x34] sm:$0xf]
        %v535 = vld [vmem:[#allocation7 + $0x38] sm:$0xf]
        %v536 = vld [vmem:[#allocation7 + $0x3c] sm:$0xf]
        %v537 = vld [vmem:[%s4] sm:$0x1]
        %v539 = vlaneseq
        %v540 = vshrl.u32 %v539, 7
        %v541 = vsub.s32 0, %v540
        %v542 = vrot.slane %v537, %v541
        %v560 = vunpack.c.l.b16 %v521
        %v561 = vunpack.c.l.b16 %v522
        %v562 = vunpack.c.l.b16 %v523
        %v563 = vunpack.c.l.b16 %v524
        %v564 = vunpack.c.l.b16 %v525
        %v565 = vunpack.c.l.b16 %v526
        %v566 = vunpack.c.l.b16 %v527
        %v567 = vunpack.c.l.b16 %v528
        %v568 = vunpack.c.l.b16 %v529
        %v569 = vunpack.c.l.b16 %v530
        %v570 = vunpack.c.l.b16 %v531
        %v571 = vunpack.c.l.b16 %v532
        %v572 = vunpack.c.l.b16 %v533
        %v573 = vunpack.c.l.b16 %v534
        %v574 = vunpack.c.l.b16 %v535
        %v575 = vunpack.c.l.b16 %v536
        %v576 = vpack.c.b16 %v561, %v560
        %v577 = vpack.c.b16 %v563, %v562
        %v578 = vpack.c.b16 %v565, %v564
        %v579 = vpack.c.b16 %v567, %v566
        %v580 = vpack.c.b16 %v569, %v568
        %v581 = vpack.c.b16 %v571, %v570
        %v582 = vpack.c.b16 %v573, %v572
        %v583 = vpack.c.b16 %v575, %v574
        %592 = vmatprep.subr.bf16.mxu0 0
        %593 = vmatpush1.bf16.msra.mxu0 %v583
        %594 = vmatprep.subr.bf16.mxu0 0
        %595 = vmatpush1.bf16.msra.mxu0 %v582
        %596 = vmatprep.subr.bf16.mxu0 0
        %597 = vmatpush1.bf16.msra.mxu0 %v581
        %598 = vmatprep.subr.bf16.mxu0 0
        %599 = vmatpush1.bf16.msra.mxu0 %v580
        %600 = vmatprep.subr.bf16.mxu0 0
        %601 = vmatpush1.bf16.msra.mxu0 %v579
        %602 = vmatprep.subr.bf16.mxu0 0
        %603 = vmatpush1.bf16.msra.mxu0 %v578
        %604 = vmatprep.subr.bf16.mxu0 0
        %605 = vmatpush1.bf16.msra.mxu0 %v577
        %606 = vmatprep.subr.bf16.mxu0 0
        %607 = vmatpush1.bf16.msra.mxu0 %v576
        %608 = vmatprep.subr.bf16.mxu0 0
        %609 = vmatpush2.bf16.msra.mxu0 0
        %610 = vmatprep.subr.bf16.mxu0 0
        %611 = vmatpush2.bf16.msra.mxu0 0
        %612 = vmatprep.subr.bf16.mxu0 0
        %613 = vmatpush2.bf16.msra.mxu0 0
        %614 = vmatprep.subr.bf16.mxu0 0
        %615 = vmatpush2.bf16.msra.mxu0 0
        %616 = vmatprep.subr.bf16.mxu0 0
        %617 = vmatpush2.bf16.msra.mxu0 0
        %618 = vmatprep.subr.bf16.mxu0 0
        %619 = vmatpush2.bf16.msra.mxu0 0
        %620 = vmatprep.subr.bf16.mxu0 0
        %621 = vmatpush2.bf16.msra.mxu0 0
        %622 = vmatprep.subr.bf16.mxu0 0
        %623 = vmatpush2.bf16.msra.mxu0 0
        %624 = vmatprep.mubr.bf16.mxu0 0
        %625 = vmatmul.mubr.bf16.gmra.mxu0 %v520
        %v626 = vpop.f32.mrf.mxu0
        %v627 = vadd.f32 %v542, %v626
        %v628 = vpop.f32.mrf.mxu0
        %v629 = vpop.f32.mrf.mxu0
        %v630 = vpop.f32.mrf.mxu0
        %631 = vdwg.mxu0
        %v632 = vmax.f32 %v627, 0.0
        %v633 = vpack.c.bf16 %v632, %v632
        %v634 = vld [vmem:[#allocation8] sm:$0xf]
        %v635 = vld [vmem:[#allocation8 + $0x4] sm:$0xf]
        %v636 = vld [vmem:[#allocation8 + $0x8] sm:$0xf]
        %v637 = vld [vmem:[#allocation8 + $0xc] sm:$0xf]
        %v638 = vld [vmem:[#allocation8 + $0x10] sm:$0xf]
        %v639 = vld [vmem:[#allocation8 + $0x14] sm:$0xf]
        %v640 = vld [vmem:[#allocation8 + $0x18] sm:$0xf]
        %v641 = vld [vmem:[#allocation8 + $0x1c] sm:$0xf]
        %v642 = vld [vmem:[#allocation8 + $0x20] sm:$0xf]
        %v643 = vld [vmem:[#allocation8 + $0x24] sm:$0xf]
        %v644 = vld [vmem:[#allocation8 + $0x28] sm:$0xf]
        %v645 = vld [vmem:[#allocation8 + $0x2c] sm:$0xf]
        %v646 = vld [vmem:[#allocation8 + $0x30] sm:$0xf]
        %v647 = vld [vmem:[#allocation8 + $0x34] sm:$0xf]
        %v648 = vld [vmem:[#allocation8 + $0x38] sm:$0xf]
        %v649 = vld [vmem:[#allocation8 + $0x3c] sm:$0xf]
        %v650 = vld [vmem:[%s6] sm:$0x1]
        %v652 = vlaneseq
        %v653 = vshrl.u32 %v652, 7
        %v654 = vsub.s32 0, %v653
        %v655 = vrot.slane %v650, %v654
        %v673 = vunpack.c.l.b16 %v634
        %v674 = vunpack.c.l.b16 %v635
        %v675 = vunpack.c.l.b16 %v636
        %v676 = vunpack.c.l.b16 %v637
        %v677 = vunpack.c.l.b16 %v638
        %v678 = vunpack.c.l.b16 %v639
        %v679 = vunpack.c.l.b16 %v640
        %v680 = vunpack.c.l.b16 %v641
        %v681 = vunpack.c.l.b16 %v642
        %v682 = vunpack.c.l.b16 %v643
        %v683 = vunpack.c.l.b16 %v644
        %v684 = vunpack.c.l.b16 %v645
        %v685 = vunpack.c.l.b16 %v646
        %v686 = vunpack.c.l.b16 %v647
        %v687 = vunpack.c.l.b16 %v648
        %v688 = vunpack.c.l.b16 %v649
        %v689 = vpack.c.b16 %v674, %v673
        %v690 = vpack.c.b16 %v676, %v675
        %v691 = vpack.c.b16 %v678, %v677
        %v692 = vpack.c.b16 %v680, %v679
        %v693 = vpack.c.b16 %v682, %v681
        %v694 = vpack.c.b16 %v684, %v683
        %v695 = vpack.c.b16 %v686, %v685
        %v696 = vpack.c.b16 %v688, %v687
        %705 = vmatprep.subr.bf16.mxu0 0
        %706 = vmatpush1.bf16.msra.mxu0 %v696
        %707 = vmatprep.subr.bf16.mxu0 0
        %708 = vmatpush1.bf16.msra.mxu0 %v695
        %709 = vmatprep.subr.bf16.mxu0 0
        %710 = vmatpush1.bf16.msra.mxu0 %v694
        %711 = vmatprep.subr.bf16.mxu0 0
        %712 = vmatpush1.bf16.msra.mxu0 %v693
        %713 = vmatprep.subr.bf16.mxu0 0
        %714 = vmatpush1.bf16.msra.mxu0 %v692
        %715 = vmatprep.subr.bf16.mxu0 0
        %716 = vmatpush1.bf16.msra.mxu0 %v691
        %717 = vmatprep.subr.bf16.mxu0 0
        %718 = vmatpush1.bf16.msra.mxu0 %v690
        %719 = vmatprep.subr.bf16.mxu0 0
        %720 = vmatpush1.bf16.msra.mxu0 %v689
        %721 = vmatprep.subr.bf16.mxu0 0
        %722 = vmatpush2.bf16.msra.mxu0 0
        %723 = vmatprep.subr.bf16.mxu0 0
        %724 = vmatpush2.bf16.msra.mxu0 0
        %725 = vmatprep.subr.bf16.mxu0 0
        %726 = vmatpush2.bf16.msra.mxu0 0
        %727 = vmatprep.subr.bf16.mxu0 0
        %728 = vmatpush2.bf16.msra.mxu0 0
        %729 = vmatprep.subr.bf16.mxu0 0
        %730 = vmatpush2.bf16.msra.mxu0 0
        %731 = vmatprep.subr.bf16.mxu0 0
        %732 = vmatpush2.bf16.msra.mxu0 0
        %733 = vmatprep.subr.bf16.mxu0 0
        %734 = vmatpush2.bf16.msra.mxu0 0
        %735 = vmatprep.subr.bf16.mxu0 0
        %736 = vmatpush2.bf16.msra.mxu0 0
        %737 = vmatprep.mubr.bf16.mxu0 0
        %738 = vmatmul.mubr.bf16.gmra.mxu0 %v633
        %v739 = vpop.f32.mrf.mxu0
        %v740 = vadd.f32 %v655, %v739
        %v741 = vpop.f32.mrf.mxu0
        %v742 = vpop.f32.mrf.mxu0
        %v743 = vpop.f32.mrf.mxu0
        %744 = vdwg.mxu0
        %v745 = vmax.f32 %v740, 0.0
        %v746 = vpack.c.bf16 %v745, %v745
        %v747 = vld [vmem:[#allocation10] sm:$0xf]
        %v748 = vld [vmem:[#allocation10 + $0x4] sm:$0xf]
        %v749 = vld [vmem:[#allocation10 + $0x8] sm:$0xf]
        %v750 = vld [vmem:[#allocation10 + $0xc] sm:$0xf]
        %v751 = vld [vmem:[#allocation10 + $0x10] sm:$0xf]
        %v752 = vld [vmem:[#allocation10 + $0x14] sm:$0xf]
        %v753 = vld [vmem:[#allocation10 + $0x18] sm:$0xf]
        %v754 = vld [vmem:[#allocation10 + $0x1c] sm:$0xf]
        %v755 = vld [vmem:[#allocation10 + $0x20] sm:$0xf]
        %v756 = vld [vmem:[#allocation10 + $0x24] sm:$0xf]
        %v757 = vld [vmem:[#allocation10 + $0x28] sm:$0xf]
        %v758 = vld [vmem:[#allocation10 + $0x2c] sm:$0xf]
        %v759 = vld [vmem:[#allocation10 + $0x30] sm:$0xf]
        %v760 = vld [vmem:[#allocation10 + $0x34] sm:$0xf]
        %v761 = vld [vmem:[#allocation10 + $0x38] sm:$0xf]
        %v762 = vld [vmem:[#allocation10 + $0x3c] sm:$0xf]
        %v763 = vld [vmem:[%s8] sm:$0x1]
        %v765 = vlaneseq
        %v766 = vshrl.u32 %v765, 7
        %v767 = vsub.s32 0, %v766
        %v768 = vrot.slane %v763, %v767
        %v786 = vunpack.c.l.b16 %v747
        %v787 = vunpack.c.l.b16 %v748
        %v788 = vunpack.c.l.b16 %v749
        %v789 = vunpack.c.l.b16 %v750
        %v790 = vunpack.c.l.b16 %v751
        %v791 = vunpack.c.l.b16 %v752
        %v792 = vunpack.c.l.b16 %v753
        %v793 = vunpack.c.l.b16 %v754
        %v794 = vunpack.c.l.b16 %v755
        %v795 = vunpack.c.l.b16 %v756
        %v796 = vunpack.c.l.b16 %v757
        %v797 = vunpack.c.l.b16 %v758
        %v798 = vunpack.c.l.b16 %v759
        %v799 = vunpack.c.l.b16 %v760
        %v800 = vunpack.c.l.b16 %v761
        %v801 = vunpack.c.l.b16 %v762
        %v802 = vpack.c.b16 %v787, %v786
        %v803 = vpack.c.b16 %v789, %v788
        %v804 = vpack.c.b16 %v791, %v790
        %v805 = vpack.c.b16 %v793, %v792
        %v806 = vpack.c.b16 %v795, %v794
        %v807 = vpack.c.b16 %v797, %v796
        %v808 = vpack.c.b16 %v799, %v798
        %v809 = vpack.c.b16 %v801, %v800
        %818 = vmatprep.subr.bf16.mxu0 0
        %819 = vmatpush1.bf16.msra.mxu0 %v809
        %820 = vmatprep.subr.bf16.mxu0 0
        %821 = vmatpush1.bf16.msra.mxu0 %v808
        %822 = vmatprep.subr.bf16.mxu0 0
        %823 = vmatpush1.bf16.msra.mxu0 %v807
        %824 = vmatprep.subr.bf16.mxu0 0
        %825 = vmatpush1.bf16.msra.mxu0 %v806
        %826 = vmatprep.subr.bf16.mxu0 0
        %827 = vmatpush1.bf16.msra.mxu0 %v805
        %828 = vmatprep.subr.bf16.mxu0 0
        %829 = vmatpush1.bf16.msra.mxu0 %v804
        %830 = vmatprep.subr.bf16.mxu0 0
        %831 = vmatpush1.bf16.msra.mxu0 %v803
        %832 = vmatprep.subr.bf16.mxu0 0
        %833 = vmatpush1.bf16.msra.mxu0 %v802
        %834 = vmatprep.subr.bf16.mxu0 0
        %835 = vmatpush2.bf16.msra.mxu0 0
        %836 = vmatprep.subr.bf16.mxu0 0
        %837 = vmatpush2.bf16.msra.mxu0 0
        %838 = vmatprep.subr.bf16.mxu0 0
        %839 = vmatpush2.bf16.msra.mxu0 0
        %840 = vmatprep.subr.bf16.mxu0 0
        %841 = vmatpush2.bf16.msra.mxu0 0
        %842 = vmatprep.subr.bf16.mxu0 0
        %843 = vmatpush2.bf16.msra.mxu0 0
        %844 = vmatprep.subr.bf16.mxu0 0
        %845 = vmatpush2.bf16.msra.mxu0 0
        %846 = vmatprep.subr.bf16.mxu0 0
        %847 = vmatpush2.bf16.msra.mxu0 0
        %848 = vmatprep.subr.bf16.mxu0 0
        %849 = vmatpush2.bf16.msra.mxu0 0
        %850 = vmatprep.mubr.bf16.mxu0 0
        %851 = vmatmul.mubr.bf16.gmra.mxu0 %v746
        %v852 = vpop.f32.mrf.mxu0
        %v853 = vadd.f32 %v768, %v852
        %v854 = vpop.f32.mrf.mxu0
        %v855 = vpop.f32.mrf.mxu0
        %v856 = vpop.f32.mrf.mxu0
        %857 = vdwg.mxu0
        %v858 = vtanh.pop %v853
        %v859 = vpack.c.bf16 %v858, %v858
        %860 = vst [vmem:[%s405] sm:$0xf] %v859
        %s861 = sand.u32 %s230, 1
        %s862 = scalar_lea.sflag [#allocation4], %s861
        %s863 = sand.u32 %s230, 1
        %s864 = smul.addr %s863, 4
        %s865 = scalar_lea.vmem [#allocation11], %s864
        // Predicated region
        $region77: #{tpu_custom_call.1} parent=55 // pred_check
          %p866 = pneg %p240
        $region78: #{tpu_custom_call.1} parent=55 // pred_check_branch
          %868 = sbr.rel (%p866) target = $region80
        $region79: #{tpu_custom_call.1} parent=55 // pred_region
          %s870 = ssub.s32 64, 64
          %871 = vsyncadd %s862, %s870
          %s872 = smul.addr %s28, 64
          %s873 = scalar_lea.hbm %s9, %s872
          %s875 = sshll.u32 %s865, 4
          %s876 = int_to_ptr.vmem [resolvable:$true] %s875
          %878 = dma.vmem_to_hbm [thread:$0]  %s876, 64, %s873, %s862
        $region80: #{tpu_custom_call.1} parent=55 // pred_fallthru
          _
      $region56: #{tpu_custom_call.1} parent=5 // pred_fallthru
        _
      %p879 = scmp.le.s32.totalorder 2, %s23
      // Predicated region
      $region81: #{tpu_custom_call.1} parent=5 // pred_check
        %p880 = pneg %p879
      $region82: #{tpu_custom_call.1} parent=5 // pred_check_branch
        %882 = sbr.rel (%p880) target = $region84
      $region83: #{tpu_custom_call.1} parent=5 // pred_region
        %s883 = ssub.s32 %s23, 2
        // Predicated region
        $region85: #{tpu_custom_call.1} parent=83 // pred_check
          %p884 = pneg %p246
        $region86: #{tpu_custom_call.1} parent=83 // pred_check_branch
          %886 = sbr.rel (%p884) target = $region88
        $region87: #{tpu_custom_call.1} parent=83 // pred_region
          %s887 = sand.u32 %s231, 1
          %s888 = scalar_lea.sflag [#allocation4], %s887
          %s889 = sand.u32 %s231, 1
          %s890 = smul.addr %s889, 4
          %s891 = scalar_lea.vmem [#allocation11], %s890
          %892 = dma.done %s888, 64
        $region88: #{tpu_custom_call.1} parent=83 // pred_fallthru
          _
      $region84: #{tpu_custom_call.1} parent=5 // pred_fallthru
        _
    $region6: #{tpu_custom_call.1} parent=1 // loop_footer
      %s27 = sadd.s32 1, %s23
    $region7: #{tpu_custom_call.1} parent=1 // loop_footer_branch
      %22 = sbr.rel target = $region3
    $region8: #{tpu_custom_call.1} parent=1 // loop_exit
      _
    %893 = vsyncpa [#allocation3], 1
    %s894 = scalar_lea.sflag [#allocation3], 1
    %895 = vsyncpa %s894, 1
    %896 = vsyncpa [#allocation6], 1
    %897 = vsyncpa [#allocation9], 1
    %898 = vsyncpa [#allocation4], 1
    %s899 = scalar_lea.sflag [#allocation4], 1
    %900 = vsyncpa %s899, 1

</llo_original>
